<compile_context>
chip_gen: v7x
topology: tpu7x:2x2x1
jax: 0.10.0
libtpu: 0.0.40
codegen_flags: <defaults>
</compile_context>

<pallas_src>
import jax
import jax.numpy as jnp
from jax import lax
from jax.experimental import pallas as pl
from jax.experimental.pallas import tpu as pltpu


def classifier_kernel(x_ref, wt_ref, b_ref, z_ref, p_ref, y_ref):
    # ---- forward(): raw class scores, class-major zT = W^T x^T -> (C, TM) ----
    x = x_ref[...]                                    # (TM, D) f32
    wt = wt_ref[...]                                  # (C, D)  f32 (resident)
    b = b_ref[...]                                    # (C, 1)  f32 (resident)
    # Contract the D dims of (C, D) and (TM, D): A @ B^T pattern on the MXU.
    z = lax.dot_general(
        wt, x, (((1,), (1,)), ((), ())),
        preferred_element_type=jnp.float32) + b        # (C, TM)
    z_ref[...] = z

    # ---- predict_proba_scores(): stable softmax along the class (sublane) axis ----
    m = jnp.max(z, axis=0, keepdims=True)             # (1, TM)  XLU sublane reduce
    e = jnp.exp(z - m)                                # (C, TM)  EUP
    s = jnp.sum(e, axis=0, keepdims=True)             # (1, TM)
    # Exact reciprocal (EUP vrcp + VPU refinement); approx=True would be the
    # pure-EUP path but loosens the 1e-5 probability tolerance.
    p = e * pl.reciprocal(s)
    p_ref[...] = p

    # ---- _classify(): argmax over probabilities.  Softmax is monotonic, so
    # argmax(p) == argmax(z); reuse m (exact equality, first-index tie-break).
    c, tm_ = z.shape
    cls = lax.broadcasted_iota(jnp.int32, (c, tm_), 0)
    cand = jnp.where(z == m, cls, jnp.int32(c))
    y_ref[...] = jnp.min(cand, axis=0, keepdims=True).astype(jnp.int32)   # (1, TM)


def _round_up(v, m):
    return ((v + m - 1) // m) * m


def classifier_pallas(x, w, b, *, tm=8192):
    """Returns (scores (N, C) f32, probs (N, C) f32, labels (N,) int32)."""
    n, d = x.shape
    d2, c = w.shape
    assert d == d2
    wt = jnp.transpose(w).astype(jnp.float32)        # (C, D), tiny, VMEM-resident
    bc = jnp.reshape(b, (c, 1)).astype(jnp.float32)  # (C, 1)

    # Row tile maps to the lane axis of the class-major outputs: multiple of
    # 256; capped so there are >= 2 row tiles whenever N allows (v7x 2-TC).
    tm = min(tm, _round_up(pl.cdiv(n, 2), 256))
    tm = max(256, _round_up(tm, 256))
    n_tiles = pl.cdiv(n, tm)

    zt, pt, y = pl.pallas_call(
        classifier_kernel,
        out_shape=(
            jax.ShapeDtypeStruct((c, n), jnp.float32),   # raw scores, class-major
            jax.ShapeDtypeStruct((c, n), jnp.float32),   # softmax probs, class-major
            jax.ShapeDtypeStruct((1, n), jnp.int32),     # predicted labels
        ),
        grid=(n_tiles,),
        in_specs=[
            pl.BlockSpec((tm, d), lambda i: (i, 0)),     # x: tiled over rows
            pl.BlockSpec((c, d), lambda i: (0, 0)),      # W^T: resident in VMEM
            pl.BlockSpec((c, 1), lambda i: (0, 0)),      # b:   resident in VMEM
        ],
        out_specs=(
            pl.BlockSpec((c, tm), lambda i: (0, i)),     # lane-dense stores
            pl.BlockSpec((c, tm), lambda i: (0, i)),
            pl.BlockSpec((1, tm), lambda i: (0, i)),
        ),
        compiler_params=pltpu.CompilerParams(
            dimension_semantics=("parallel",)),          # row tiles shard on v7x
    )(x, wt, bc)

    # Present the original module's (N, C) layout; see TODO(synk) above.
    return zt.T, pt.T, jnp.reshape(y, (n,))


def reference(x, w, b):
    z = x @ w + b[None, :]
    zs = z - jnp.max(z, axis=1, keepdims=True)
    e = jnp.exp(zs)
    p = e / jnp.sum(e, axis=1, keepdims=True)
    y = jnp.argmax(p, axis=1).astype(jnp.int32)
    return z, p, y


if __name__ == "__main__":
    # Small shapes consistent with an (N, D) -> (N, C) classifier; N=500 with
    # the tile clamp gives a 2-step grid with a partial final block (244 rows),
    # exercising both the multi-tile and masked-boundary paths.
    N, D, C = 500, 32, 8

    key = jax.random.PRNGKey(0)
    kx, kw, kb = jax.random.split(key, 3)
    x = jax.random.normal(kx, (N, D), dtype=jnp.float32)
    # Deterministic linear-model parameters (Xavier-ish scaling).
    w = jax.random.normal(kw, (D, C), dtype=jnp.float32) * (1.0 / jnp.sqrt(D))
    b = jax.random.normal(kb, (C,), dtype=jnp.float32) * 0.1

    z, p, y = classifier_pallas(x, w, b)
    jax.block_until_ready((z, p, y))

    z_ref, p_ref, y_ref = reference(x, w, b)
    assert z.shape == (N, C) and p.shape == (N, C) and y.shape == (N,)
    assert jnp.allclose(z, z_ref, atol=1e-4, rtol=1e-4)
    assert jnp.allclose(p, p_ref, atol=1e-5, rtol=1e-4)
    assert jnp.all(y == y_ref)
    assert jnp.allclose(jnp.sum(p, axis=1), 1.0, atol=1e-5)

    print("KERNEL_OK")
</pallas_src>

<mosaic_0001>
module attributes {stable_mosaic.version = 11 : i64} {
  func.func @classifier_kernel(%arg0: i32, %arg1: memref<256x32xf32, #tpu.memory_space<vmem>>, %arg2: memref<8x32xf32, #tpu.memory_space<vmem>>, %arg3: memref<8x1xf32, #tpu.memory_space<vmem>>, %arg4: memref<8x256xf32, #tpu.memory_space<vmem>>, %arg5: memref<8x256xf32, #tpu.memory_space<vmem>>, %arg6: memref<1x256xi32, #tpu.memory_space<vmem>>) attributes {dimension_semantics = [#tpu.dimension_semantics<parallel>], iteration_bounds = array<i64: 2>, scalar_prefetch = 0 : i64, scratch_operands = 0 : i64, tpu.core_type = #tpu.core_type<tc>, window_params = [{transform_indices = @transform_0, window_bounds = array<i64: 256, 32>}, {pipeline_mode = #tpu.pipeline_mode<synchronous>, transform_indices = @transform_1, window_bounds = array<i64: 8, 32>}, {pipeline_mode = #tpu.pipeline_mode<synchronous>, transform_indices = @transform_2, window_bounds = array<i64: 8, 1>}, {transform_indices = @transform_3, window_bounds = array<i64: 8, 256>}, {transform_indices = @transform_4, window_bounds = array<i64: 8, 256>}, {transform_indices = @transform_5, window_bounds = array<i64: 1, 256>}]} {
    %c0 = arith.constant 0 : index
    %c0_0 = arith.constant 0 : index
    %0 = vector.load %arg1[%c0, %c0_0] : memref<256x32xf32, #tpu.memory_space<vmem>>, vector<256x32xf32>
    %c0_1 = arith.constant 0 : index
    %c0_2 = arith.constant 0 : index
    %1 = vector.load %arg2[%c0_1, %c0_2] : memref<8x32xf32, #tpu.memory_space<vmem>>, vector<8x32xf32>
    %c0_3 = arith.constant 0 : index
    %c0_4 = arith.constant 0 : index
    %2 = vector.load %arg3[%c0_3, %c0_4] : memref<8x1xf32, #tpu.memory_space<vmem>>, vector<8x1xf32>
    %cst = arith.constant dense<0.000000e+00> : vector<8x256xf32>
    %3 = tpu.matmul %1, %0, %cst {dimension_numbers = #tpu.dot_dimension_numbers<[1], [1], [0], [0], [0, 0, 1, 0], [], []>} : vector<8x32xf32>, vector<256x32xf32>, vector<8x256xf32> -> vector<8x256xf32>
    %4 = vector.broadcast %2 : vector<8x1xf32> to vector<8x256xf32>
    %5 = arith.addf %3, %4 : vector<8x256xf32>
    %c0_5 = arith.constant 0 : index
    %c0_6 = arith.constant 0 : index
    %6 = vector.load %arg4[%c0_5, %c0_6] : memref<8x256xf32, #tpu.memory_space<vmem>>, vector<8x256xf32>
    tpu.vector_store %arg4[%c0_5, %c0_6], %5 {strides = array<i32>} : memref<8x256xf32, #tpu.memory_space<vmem>>, vector<8x256xf32>,
    %cst_7 = arith.constant dense<0xFF800000> : vector<256xf32>
    %7 = vector.multi_reduction <maximumf>, %5, %cst_7 [0] : vector<8x256xf32> to vector<256xf32>
    %8 = vector.shape_cast %7 : vector<256xf32> to vector<1x256xf32>
    %9 = vector.broadcast %8 : vector<1x256xf32> to vector<8x256xf32>
    %10 = arith.subf %5, %9 : vector<8x256xf32>
    %11 = math.exp %10 : vector<8x256xf32>
    %cst_8 = arith.constant dense<0.000000e+00> : vector<256xf32>
    %12 = vector.multi_reduction <add>, %11, %cst_8 [0] : vector<8x256xf32> to vector<256xf32>
    %13 = vector.shape_cast %12 : vector<256xf32> to vector<1x256xf32>
    %14 = tpu.reciprocal %13 : vector<1x256xf32> -> vector<1x256xf32>
    %15 = vector.broadcast %14 : vector<1x256xf32> to vector<8x256xf32>
    %16 = arith.mulf %11, %15 : vector<8x256xf32>
    %c0_9 = arith.constant 0 : index
    %c0_10 = arith.constant 0 : index
    %17 = vector.load %arg5[%c0_9, %c0_10] : memref<8x256xf32, #tpu.memory_space<vmem>>, vector<8x256xf32>
    tpu.vector_store %arg5[%c0_9, %c0_10], %16 {strides = array<i32>} : memref<8x256xf32, #tpu.memory_space<vmem>>, vector<8x256xf32>,
    %18 = tpu.iota {dimensions = array<i32: 0>} : vector<8x256xi32>
    %19 = vector.broadcast %8 : vector<1x256xf32> to vector<8x256xf32>
    %20 = arith.cmpf oeq, %5, %19 : vector<8x256xf32>
    %c8_i32 = arith.constant 8 : i32
    %21 = vector.broadcast %c8_i32 : i32 to vector<8x256xi32>
    %22 = arith.select %20, %18, %21 : vector<8x256xi1>, vector<8x256xi32>
    %cst_11 = arith.constant dense<2147483647> : vector<256xi32>
    %23 = vector.multi_reduction <minsi>, %22, %cst_11 [0] : vector<8x256xi32> to vector<256xi32>
    %24 = vector.shape_cast %23 : vector<256xi32> to vector<1x256xi32>
    %c0_12 = arith.constant 0 : index
    %c0_13 = arith.constant 0 : index
    %25 = vector.load %arg6[%c0_12, %c0_13] : memref<1x256xi32, #tpu.memory_space<vmem>>, vector<1x256xi32>
    tpu.vector_store %arg6[%c0_12, %c0_13], %24 {strides = array<i32>} : memref<1x256xi32, #tpu.memory_space<vmem>>, vector<1x256xi32>,
    return
  }
  func.func @transform_0(%arg0: i32) -> (i32, i32) {
    %c0_i32 = arith.constant 0 : i32
    %c0_i32_0 = arith.constant 0 : i32
    return %arg0, %c0_i32 : i32, i32
  }
  func.func @transform_1(%arg0: i32) -> (i32, i32) {
    %c0_i32 = arith.constant 0 : i32
    %c0_i32_0 = arith.constant 0 : i32
    %c0_i32_1 = arith.constant 0 : i32
    return %c0_i32, %c0_i32_0 : i32, i32
  }
  func.func @transform_2(%arg0: i32) -> (i32, i32) {
    %c0_i32 = arith.constant 0 : i32
    %c0_i32_0 = arith.constant 0 : i32
    %c0_i32_1 = arith.constant 0 : i32
    return %c0_i32, %c0_i32_0 : i32, i32
  }
  func.func @transform_3(%arg0: i32) -> (i32, i32) {
    %c0_i32 = arith.constant 0 : i32
    %c0_i32_0 = arith.constant 0 : i32
    return %c0_i32, %arg0 : i32, i32
  }
  func.func @transform_4(%arg0: i32) -> (i32, i32) {
    %c0_i32 = arith.constant 0 : i32
    %c0_i32_0 = arith.constant 0 : i32
    return %c0_i32, %arg0 : i32, i32
  }
  func.func @transform_5(%arg0: i32) -> (i32, i32) {
    %c0_i32 = arith.constant 0 : i32
    %c0_i32_0 = arith.constant 0 : i32
    return %c0_i32, %arg0 : i32, i32
  }
}

</mosaic_0001>

<llo_original>
// kernel: tpu_custom_call.1
$region0: #{tpu_custom_call.1}
  #allocation0 [shape = 'u32[]', space=smem, size = 0x4, offset = 0x4, fixed_abs, tag = 'smem constant byte address 0x4 - core index']
  #allocation1 [shape = 'u32[144,128]{1,0:T(1,128)}', space=vmem, size = 0x12000, scoped, tag = 'internal scratch']
  %s0 = inlined_call_operand.vmem [shape: f32[500,32], index: 0, kind: input, shape index: {}]
  %s1 = inlined_call_operand.vmem [shape: f32[8,32], index: 1, kind: input, shape index: {}]
  %s2 = inlined_call_operand.vmem [shape: f32[8,1], index: 2, kind: input, shape index: {}]
  %s3 = inlined_call_operand.hbm [shape: f32[8,500], index: 3, kind: output, shape index: {0}]
  %s4 = inlined_call_operand.hbm [shape: f32[8,500], index: 4, kind: output, shape index: {1}]
  %s5 = inlined_call_operand.hbm [shape: s32[1,500], index: 5, kind: output, shape index: {2}]
  %6 = xla_tuple %s3, %s4, %s5
  %s7 = sld [smem:[#allocation0]]
  $region61: #{tpu_custom_call.1} parent=0
    _
  %s9 = ssub.s32 1, %s7
  %s10 = scalar_select 0, %s9, %s7
  $region1: #{tpu_custom_call.1} parent=0
    #allocation2 [shape = 'u8[16384]{0}', space=vmem, size = 0x4000, scoped, tag = 'output window, operand 0']
    #allocation3 [shape = 's32[2]{0}', space=sflag, size = 0x8, scoped, tag = 'scoped memory for tpu_custom_call.1']
    #allocation4 [shape = 'u8[16384]{0}', space=vmem, size = 0x4000, scoped, tag = 'output window, operand 1']
    #allocation5 [shape = 's32[2]{0}', space=sflag, size = 0x8, scoped, tag = 'scoped memory for tpu_custom_call.1']
    #allocation6 [shape = 'u8[2048]{0}', space=vmem, size = 0x800, scoped, tag = 'output window, operand 2']
    %11 = vsyncpa [#allocation3], 0
    %s12 = scalar_lea.sflag [#allocation3], 1
    %13 = vsyncpa %s12, 0
    %14 = vsyncpa [#allocation5], 0
    %s15 = scalar_lea.sflag [#allocation5], 1
    %16 = vsyncpa %s15, 0
    loop: start=0, step=1, limit=4
    $region2: #{tpu_custom_call.1} parent=1 // loop_pre_header
      _
    $region3: #{tpu_custom_call.1} parent=1 // loop_header
      %s18 = sphi 0, %s22
      %p19 = scmp.ge.s32.totalorder %s18, 4
      %s28 = sphi 0, %s30
      %s31 = sphi 0, %s28
      %s32 = sphi 0, %s31
      %s48 = sphi 0, %s32
      %s52 = sphi 0, %s52
      %s54 = sphi 0, %s52
      %s55 = sphi 0, %s54
      %s69 = sphi 0, %s55
      %s73 = sphi 0, %s73
      %s75 = sphi 0, %s73
      %s76 = sphi 0, %s75
      %s90 = sphi 0, %s76
      %s96 = sphi 0, %s98
      %s99 = sphi 0, %s96
      %s100 = sphi 0, %s99
      %s116 = sphi 0, %s100
      %s122 = sphi 0, %s124
      %s125 = sphi 0, %s122
      %s126 = sphi 0, %s125
      %s142 = sphi 0, %s126
      %s148 = sphi 0, %s150
      %s151 = sphi 0, %s148
      %s152 = sphi 0, %s151
      %s168 = sphi 0, %s152
    $region4: #{tpu_custom_call.1} parent=1 // loop_header_branch
      %21 = sbr.rel (%p19) target = $region8
    $region5: #{tpu_custom_call.1} parent=1 // loop_body
      %s23 = ssub.s32 %s18, 1
      %s24 = ssub.s32 %s18, 2
      %s25 = sadd.s32 %s18, 1
      %s26 = ssub.s32 %s18, %s25
      %p27 = scmp.eq.s32.totalorder %s26, 0
      %s29 = sadd.s32 %s28, 1
      %s30 = scalar_select %p27, %s28, %s29
      %p33 = pneg %p27
      %p34 = scmp.eq.s32.totalorder %s18, 1
      %p35 = por %p33, %p34
      %p36 = scmp.ne.s32.totalorder %s28, %s31
      %p37 = scmp.eq.s32.totalorder %s18, 0
      %p38 = por %p36, %p37
      %p39 = scmp.ne.s32.totalorder %s28, %s31
      %p40 = scmp.eq.s32.totalorder %s23, 1
      %p41 = por %p39, %p40
      %p42 = scmp.ne.s32.totalorder %s31, %s32
      %p43 = scmp.eq.s32.totalorder %s23, 0
      %p44 = por %p42, %p43
      %p45 = scmp.ne.s32.totalorder %s31, %s32
      %p46 = scmp.eq.s32.totalorder %s24, 1
      %p47 = por %p45, %p46
      %p49 = scmp.ne.s32.totalorder %s32, %s48
      %p50 = scmp.eq.s32.totalorder %s24, 0
      %p51 = por %p49, %p50
      %s53 = sadd.s32 %s52, 1
      %p56 = scmp.eq.s32.totalorder %s18, 1
      %p57 = scmp.ne.s32.totalorder %s52, %s54
      %p58 = scmp.eq.s32.totalorder %s18, 0
      %p59 = por %p57, %p58
      %p60 = scmp.ne.s32.totalorder %s52, %s54
      %p61 = scmp.eq.s32.totalorder %s23, 1
      %p62 = por %p60, %p61
      %p63 = scmp.ne.s32.totalorder %s54, %s55
      %p64 = scmp.eq.s32.totalorder %s23, 0
      %p65 = por %p63, %p64
      %p66 = scmp.ne.s32.totalorder %s54, %s55
      %p67 = scmp.eq.s32.totalorder %s24, 1
      %p68 = por %p66, %p67
      %p70 = scmp.ne.s32.totalorder %s55, %s69
      %p71 = scmp.eq.s32.totalorder %s24, 0
      %p72 = por %p70, %p71
      %s74 = sadd.s32 %s73, 1
      %p77 = scmp.eq.s32.totalorder %s18, 1
      %p78 = scmp.ne.s32.totalorder %s73, %s75
      %p79 = scmp.eq.s32.totalorder %s18, 0
      %p80 = por %p78, %p79
      %p81 = scmp.ne.s32.totalorder %s73, %s75
      %p82 = scmp.eq.s32.totalorder %s23, 1
      %p83 = por %p81, %p82
      %p84 = scmp.ne.s32.totalorder %s75, %s76
      %p85 = scmp.eq.s32.totalorder %s23, 0
      %p86 = por %p84, %p85
      %p87 = scmp.ne.s32.totalorder %s75, %s76
      %p88 = scmp.eq.s32.totalorder %s24, 1
      %p89 = por %p87, %p88
      %p91 = scmp.ne.s32.totalorder %s76, %s90
      %p92 = scmp.eq.s32.totalorder %s24, 0
      %p93 = por %p91, %p92
      %s94 = ssub.s32 %s18, %s25
      %p95 = scmp.eq.s32.totalorder %s94, 0
      %s97 = sadd.s32 %s96, 1
      %s98 = scalar_select %p95, %s96, %s97
      %p101 = pneg %p95
      %p102 = scmp.eq.s32.totalorder %s18, 1
      %p103 = por %p101, %p102
      %p104 = scmp.ne.s32.totalorder %s96, %s99
      %p105 = scmp.eq.s32.totalorder %s18, 0
      %p106 = por %p104, %p105
      %p107 = scmp.ne.s32.totalorder %s96, %s99
      %p108 = scmp.eq.s32.totalorder %s23, 1
      %p109 = por %p107, %p108
      %p110 = scmp.ne.s32.totalorder %s99, %s100
      %p111 = scmp.eq.s32.totalorder %s23, 0
      %p112 = por %p110, %p111
      %p113 = scmp.ne.s32.totalorder %s99, %s100
      %p114 = scmp.eq.s32.totalorder %s24, 1
      %p115 = por %p113, %p114
      %p117 = scmp.ne.s32.totalorder %s100, %s116
      %p118 = scmp.eq.s32.totalorder %s24, 0
      %p119 = por %p117, %p118
      %s120 = ssub.s32 %s18, %s25
      %p121 = scmp.eq.s32.totalorder %s120, 0
      %s123 = sadd.s32 %s122, 1
      %s124 = scalar_select %p121, %s122, %s123
      %p127 = pneg %p121
      %p128 = scmp.eq.s32.totalorder %s18, 1
      %p129 = por %p127, %p128
      %p130 = scmp.ne.s32.totalorder %s122, %s125
      %p131 = scmp.eq.s32.totalorder %s18, 0
      %p132 = por %p130, %p131
      %p133 = scmp.ne.s32.totalorder %s122, %s125
      %p134 = scmp.eq.s32.totalorder %s23, 1
      %p135 = por %p133, %p134
      %p136 = scmp.ne.s32.totalorder %s125, %s126
      %p137 = scmp.eq.s32.totalorder %s23, 0
      %p138 = por %p136, %p137
      %p139 = scmp.ne.s32.totalorder %s125, %s126
      %p140 = scmp.eq.s32.totalorder %s24, 1
      %p141 = por %p139, %p140
      %p143 = scmp.ne.s32.totalorder %s126, %s142
      %p144 = scmp.eq.s32.totalorder %s24, 0
      %p145 = por %p143, %p144
      %s146 = ssub.s32 %s18, %s25
      %p147 = scmp.eq.s32.totalorder %s146, 0
      %s149 = sadd.s32 %s148, 1
      %s150 = scalar_select %p147, %s148, %s149
      %p153 = pneg %p147
      %p154 = scmp.eq.s32.totalorder %s18, 1
      %p155 = por %p153, %p154
      %p156 = scmp.ne.s32.totalorder %s148, %s151
      %p157 = scmp.eq.s32.totalorder %s18, 0
      %p158 = por %p156, %p157
      %p159 = scmp.ne.s32.totalorder %s148, %s151
      %p160 = scmp.eq.s32.totalorder %s23, 1
      %p161 = por %p159, %p160
      %p162 = scmp.ne.s32.totalorder %s151, %s152
      %p163 = scmp.eq.s32.totalorder %s23, 0
      %p164 = por %p162, %p163
      %p165 = scmp.ne.s32.totalorder %s151, %s152
      %p166 = scmp.eq.s32.totalorder %s24, 1
      %p167 = por %p165, %p166
      %p169 = scmp.ne.s32.totalorder %s152, %s168
      %p170 = scmp.eq.s32.totalorder %s24, 0
      %p171 = por %p169, %p170
      %p172 = scmp.le.s32.totalorder 1, %s18
      %p173 = scmp.lt.s32.totalorder %s18, 3
      %p174 = pnand %p172, %p173
      %p175 = pneg %p174
      // Predicated region
      $region9: #{tpu_custom_call.1} parent=5 // pred_check
        _
      $region10: #{tpu_custom_call.1} parent=5 // pred_check_branch
        %177 = sbr.rel (%p174) target = $region12
      $region11: #{tpu_custom_call.1} parent=5 // pred_region
        %s178 = ssub.s32 %s18, 1
        // Predicated region
        $region13: #{tpu_custom_call.1} parent=11 // pred_check
          %p179 = pneg %p65
        $region14: #{tpu_custom_call.1} parent=11 // pred_check_branch
          %181 = sbr.rel (%p179) target = $region16
        $region15: #{tpu_custom_call.1} parent=11 // pred_region
          _
        $region16: #{tpu_custom_call.1} parent=11 // pred_fallthru
          _
        // Predicated region
        $region17: #{tpu_custom_call.1} parent=11 // pred_check
          %p182 = pneg %p86
        $region18: #{tpu_custom_call.1} parent=11 // pred_check_branch
          %184 = sbr.rel (%p182) target = $region20
        $region19: #{tpu_custom_call.1} parent=11 // pred_region
          _
        $region20: #{tpu_custom_call.1} parent=11 // pred_fallthru
          _
      $region12: #{tpu_custom_call.1} parent=5 // pred_fallthru
        _
      %p185 = scmp.lt.s32.totalorder %s18, 2
      // Predicated region
      $region21: #{tpu_custom_call.1} parent=5 // pred_check
        %p186 = pneg %p185
      $region22: #{tpu_custom_call.1} parent=5 // pred_check_branch
        %188 = sbr.rel (%p186) target = $region24
      $region23: #{tpu_custom_call.1} parent=5 // pred_region
        // Predicated region
        $region25: #{tpu_custom_call.1} parent=23 // pred_check
          %p189 = pneg %p38
        $region26: #{tpu_custom_call.1} parent=23 // pred_check_branch
          %191 = sbr.rel (%p189) target = $region28
        $region27: #{tpu_custom_call.1} parent=23 // pred_region
          %s192 = smul.u32 32, %s18
          %s193 = ssub.s32 63, %s192
          %p194 = scmp.lt.s32.totalorder %s193, 32
          %s195 = scalar_select %p194, %s193, 32
          %s196 = smul.u32 128, %s195
          %p197 = scmp.lt.s32.totalorder %s192, 62
          %s198 = scalar_select %p197, %s192, 62
          %s199 = smul.addr %s198, 8
          %s200 = scalar_lea.vmem %s0, %s199
          %s201 = smul.u32 32, %s18
          %s202 = ssub.s32 63, %s201
          %p203 = scmp.lt.s32.totalorder %s202, 32
          %s204 = scalar_select %p203, %s202, 32
          %s205 = smul.u32 128, %s204
        $region28: #{tpu_custom_call.1} parent=23 // pred_fallthru
          _
      $region24: #{tpu_custom_call.1} parent=5 // pred_fallthru
        _
      %p206 = scmp.le.s32.totalorder 1, %s18
      %p207 = scmp.lt.s32.totalorder %s18, 3
      %p208 = pnand %p206, %p207
      %p209 = pneg %p208
      // Predicated region
      $region29: #{tpu_custom_call.1} parent=5 // pred_check
        _
      $region30: #{tpu_custom_call.1} parent=5 // pred_check_branch
        %211 = sbr.rel (%p208) target = $region32
      $region31: #{tpu_custom_call.1} parent=5 // pred_region
        %s212 = ssub.s32 %s18, 1
        %s213 = smul.u32 32, %s23
        %s214 = ssub.s32 63, %s213
        %p215 = scmp.lt.s32.totalorder %s214, 32
        %s216 = scalar_select %p215, %s214, 32
        %s217 = smul.u32 128, %s216
        %p218 = scmp.lt.s32.totalorder %s213, 62
        %s219 = scalar_select %p218, %s213, 62
        %s220 = smul.addr %s219, 8
        %s221 = scalar_lea.vmem %s0, %s220
        %p222 = pneg %p44
        %p223 = pneg %p41
        %p224 = pneg %p65
        %p225 = pneg %p62
        %p226 = pneg %p86
        %p227 = pneg %p83
        %p228 = pneg %p112
        %p229 = pneg %p109
        %s230 = sand.u32 %s99, 1
        %s231 = scalar_lea.sflag [#allocation3], %s230
        %s232 = sand.u32 %s99, 1
        %s233 = smul.addr %s232, 16
        %s234 = scalar_lea.vmem [#allocation2], %s233
        %p235 = pneg %p138
        %p236 = pneg %p135
        %s237 = sand.u32 %s23, 1
        %s238 = scalar_lea.sflag [#allocation5], %s237
        %s239 = sand.u32 %s125, 1
        %s240 = smul.addr %s239, 16
        %s241 = scalar_lea.vmem [#allocation4], %s240
        %p242 = pneg %p164
        %p243 = pneg %p161
        %s244 = sand.u32 %s23, 1
        %s245 = scalar_lea.sflag [#allocation5], %s244
        %s246 = sand.u32 %s151, 1
        %s247 = smul.addr %s246, 2
        %s248 = scalar_lea.vmem [#allocation6], %s247
        %s249 = smul.u32 32, %s23
        %s250 = ssub.s32 63, %s249
        %p251 = scmp.lt.s32.totalorder %s250, 32
        %s252 = scalar_select %p251, %s250, 32
        %s253 = smul.u32 128, %s252
        %p254 = scmp.lt.s32.totalorder %s249, 62
        %s255 = scalar_select %p254, %s249, 62
        %s256 = smul.addr %s255, 8
        %s257 = scalar_lea.vmem %s0, %s256
        %s258 = smul.u32 32, %s23
        %s259 = ssub.s32 63, %s258
        %p260 = scmp.lt.s32.totalorder %s259, 32
        %s261 = scalar_select %p260, %s259, 32
        %s262 = smul.u32 128, %s261
        %s263 = smul.u32 2, %s23
        %s264 = smul.u32 2, %s23
        %s265 = smul.u32 2, %s23
        %v266 = vld [vmem:[%s257] sm:$0xff]
        %v267 = vld [vmem:[%s257 + $0x8] sm:$0xff]
        %v268 = vld [vmem:[%s257 + $0x10] sm:$0xff]
        %v269 = vld [vmem:[%s257 + $0x18] sm:$0xff]
        %v270 = vld [vmem:[%s257 + $0x20] sm:$0xff]
        %v271 = vld [vmem:[%s257 + $0x28] sm:$0xff]
        %v272 = vld [vmem:[%s257 + $0x30] sm:$0xff]
        %v273 = vld [vmem:[%s257 + $0x38] sm:$0xff]
        %v274 = vld [vmem:[%s257 + $0x40] sm:$0xff]
        %v275 = vld [vmem:[%s257 + $0x48] sm:$0xff]
        %v276 = vld [vmem:[%s257 + $0x50] sm:$0xff]
        %v277 = vld [vmem:[%s257 + $0x58] sm:$0xff]
        %v278 = vld [vmem:[%s257 + $0x60] sm:$0xff]
        %v279 = vld [vmem:[%s257 + $0x68] sm:$0xff]
        %v280 = vld [vmem:[%s257 + $0x70] sm:$0xff]
        %v281 = vld [vmem:[%s257 + $0x78] sm:$0xff]
        %v282 = vld [vmem:[%s257 + $0x80] sm:$0xff]
        %v283 = vld [vmem:[%s257 + $0x88] sm:$0xff]
        %v284 = vld [vmem:[%s257 + $0x90] sm:$0xff]
        %v285 = vld [vmem:[%s257 + $0x98] sm:$0xff]
        %v286 = vld [vmem:[%s257 + $0xa0] sm:$0xff]
        %v287 = vld [vmem:[%s257 + $0xa8] sm:$0xff]
        %v288 = vld [vmem:[%s257 + $0xb0] sm:$0xff]
        %v289 = vld [vmem:[%s257 + $0xb8] sm:$0xff]
        %v290 = vld [vmem:[%s257 + $0xc0] sm:$0xff]
        %v291 = vld [vmem:[%s257 + $0xc8] sm:$0xff]
        %v292 = vld [vmem:[%s257 + $0xd0] sm:$0xff]
        %v293 = vld [vmem:[%s257 + $0xd8] sm:$0xff]
        %v294 = vld [vmem:[%s257 + $0xe0] sm:$0xff]
        %v295 = vld [vmem:[%s257 + $0xe8] sm:$0xff]
        %v296 = vld [vmem:[%s257 + $0xf0] sm:$0xff]
        %v297 = vld [vmem:[%s257 + $0xf8] sm:$0xff]
        %v298 = vld [vmem:[%s1] sm:$0xff]
        %v299 = vld [vmem:[%s2] sm:$0xff]
        %301 = vset.pattern.permute.xlu0 0
        %302 = vperm.xlu0 %301, %v299
        %v303 = vpop.permute.xlu0 %302
        %vm305 = vcmask 261120
        %v307 = vsel %vm305, %v298, 0
        %v310 = vsel %vm305, %v266, 0
        %v313 = vsel %vm305, %v267, 0
        %v316 = vsel %vm305, %v268, 0
        %v319 = vsel %vm305, %v269, 0
        %v322 = vsel %vm305, %v270, 0
        %v325 = vsel %vm305, %v271, 0
        %v328 = vsel %vm305, %v272, 0
        %v331 = vsel %vm305, %v273, 0
        %v334 = vsel %vm305, %v274, 0
        %v337 = vsel %vm305, %v275, 0
        %v340 = vsel %vm305, %v276, 0
        %v343 = vsel %vm305, %v277, 0
        %v346 = vsel %vm305, %v278, 0
        %v349 = vsel %vm305, %v279, 0
        %v352 = vsel %vm305, %v280, 0
        %v355 = vsel %vm305, %v281, 0
        %v358 = vsel %vm305, %v282, 0
        %v361 = vsel %vm305, %v283, 0
        %v364 = vsel %vm305, %v284, 0
        %v367 = vsel %vm305, %v285, 0
        %v370 = vsel %vm305, %v286, 0
        %v373 = vsel %vm305, %v287, 0
        %v376 = vsel %vm305, %v288, 0
        %v379 = vsel %vm305, %v289, 0
        %v382 = vsel %vm305, %v290, 0
        %v385 = vsel %vm305, %v291, 0
        %v388 = vsel %vm305, %v292, 0
        %v391 = vsel %vm305, %v293, 0
        %v394 = vsel %vm305, %v294, 0
        %v397 = vsel %vm305, %v295, 0
        %v400 = vsel %vm305, %v296, 0
        %v403 = vsel %vm305, %v297, 0
        %405 = vmatprep.subr.mxu0 0.0
        %406 = vmatpush1.xpose.msra.mxu0 %v310
        %407 = vmatprep.subr.mxu0 0.0
        %408 = vmatpush1.xpose.msra.mxu0 %v313
        %409 = vmatprep.subr.mxu0 0.0
        %410 = vmatpush1.xpose.msra.mxu0 %v316
        %411 = vmatprep.subr.mxu0 0.0
        %412 = vmatpush1.xpose.msra.mxu0 %v319
        %413 = vmatprep.subr.mxu0 0.0
        %414 = vmatpush1.xpose.msra.mxu0 %v322
        %415 = vmatprep.subr.mxu0 0.0
        %416 = vmatpush1.xpose.msra.mxu0 %v325
        %417 = vmatprep.subr.mxu0 0.0
        %418 = vmatpush1.xpose.msra.mxu0 %v328
        %419 = vmatprep.subr.mxu0 0.0
        %420 = vmatpush1.xpose.msra.mxu0 %v331
        %421 = vmatprep.subr.mxu0 0.0
        %422 = vmatpush1.xpose.msra.mxu0 %v334
        %423 = vmatprep.subr.mxu0 0.0
        %424 = vmatpush1.xpose.msra.mxu0 %v337
        %425 = vmatprep.subr.mxu0 0.0
        %426 = vmatpush1.xpose.msra.mxu0 %v340
        %427 = vmatprep.subr.mxu0 0.0
        %428 = vmatpush1.xpose.msra.mxu0 %v343
        %429 = vmatprep.subr.mxu0 0.0
        %430 = vmatpush1.xpose.msra.mxu0 %v346
        %431 = vmatprep.subr.mxu0 0.0
        %432 = vmatpush1.xpose.msra.mxu0 %v349
        %433 = vmatprep.subr.mxu0 0.0
        %434 = vmatpush1.xpose.msra.mxu0 %v352
        %435 = vmatprep.subr.mxu0 0.0
        %436 = vmatpush1.xpose.msra.mxu0 %v355
        %437 = vmatprep.subr.mxu0 0.0
        %438 = vmatpush1.xpose.msra.mxu0 %v358
        %439 = vmatprep.subr.mxu0 0.0
        %440 = vmatpush1.xpose.msra.mxu0 %v361
        %441 = vmatprep.subr.mxu0 0.0
        %442 = vmatpush1.xpose.msra.mxu0 %v364
        %443 = vmatprep.subr.mxu0 0.0
        %444 = vmatpush1.xpose.msra.mxu0 %v367
        %445 = vmatprep.subr.mxu0 0.0
        %446 = vmatpush1.xpose.msra.mxu0 %v370
        %447 = vmatprep.subr.mxu0 0.0
        %448 = vmatpush1.xpose.msra.mxu0 %v373
        %449 = vmatprep.subr.mxu0 0.0
        %450 = vmatpush1.xpose.msra.mxu0 %v376
        %451 = vmatprep.subr.mxu0 0.0
        %452 = vmatpush1.xpose.msra.mxu0 %v379
        %453 = vmatprep.subr.mxu0 0.0
        %454 = vmatpush1.xpose.msra.mxu0 %v382
        %455 = vmatprep.subr.mxu0 0.0
        %456 = vmatpush1.xpose.msra.mxu0 %v385
        %457 = vmatprep.subr.mxu0 0.0
        %458 = vmatpush1.xpose.msra.mxu0 %v388
        %459 = vmatprep.subr.mxu0 0.0
        %460 = vmatpush1.xpose.msra.mxu0 %v391
        %461 = vmatprep.subr.mxu0 0.0
        %462 = vmatpush1.xpose.msra.mxu0 %v394
        %463 = vmatprep.subr.mxu0 0.0
        %464 = vmatpush1.xpose.msra.mxu0 %v397
        %465 = vmatprep.subr.mxu0 0.0
        %466 = vmatpush1.xpose.msra.mxu0 %v400
        %467 = vmatprep.subr.mxu0 0.0
        %468 = vmatpush1.xpose.msra.mxu0 %v403
        %469 = vmatprep.mubr.f32.mxu0 0.0
        %470 = vmatmul.mubr.f32.gmra.mrb[0].mxu0 %v307
        %v471 = vpop.f32.mrb[0].mxu0
        %v472 = vadd.f32 %v303, %v471
        %v473 = vpop.f32.mrb[0].mxu0
        %v474 = vadd.f32 %v303, %v473
        %475 = vdwg.mxu0
        %476 = vst [vmem:[%s234] sm:$0xff] %v472
        %477 = vst [vmem:[%s234 + $0x8] sm:$0xff] %v474
        %v478 = vrot.slane %v472, 4
        %v479 = vmax.f32 %v472, %v478
        %v480 = vrot.slane %v479, 2
        %v481 = vmax.f32 %v479, %v480
        %v482 = vrot.slane %v481, 1
        %v483 = vmax.f32 %v481, %v482
        %v484 = vrot.slane %v474, 4
        %v485 = vmax.f32 %v474, %v484
        %v486 = vrot.slane %v485, 2
        %v487 = vmax.f32 %v485, %v486
        %v488 = vrot.slane %v487, 1
        %v489 = vmax.f32 %v487, %v488
        %v490 = vsub.f32 %v472, %v483
        %v491 = vsub.f32 %v474, %v489
        %v492 = vmul.f32 %v490, 1.442695
        %v493 = vpow.pop %v492
        %v494 = vmul.f32 %v491, 1.442695
        %v495 = vpow.pop %v494
        %v496 = vrot.slane %v493, 4
        %v497 = vadd.f32 %v493, %v496
        %v498 = vrot.slane %v497, 2
        %v499 = vadd.f32 %v497, %v498
        %v500 = vrot.slane %v499, 1
        %v501 = vadd.f32 %v499, %v500
        %v502 = vrot.slane %v495, 4
        %v503 = vadd.f32 %v495, %v502
        %v504 = vrot.slane %v503, 2
        %v505 = vadd.f32 %v503, %v504
        %v506 = vrot.slane %v505, 1
        %v507 = vadd.f32 %v505, %v506
        %v508 = vrcp.pop %v501
        %v509 = vrcp.pop %v507
        %v510 = vmul.f32 %v493, %v508
        %v511 = vmul.f32 %v495, %v509
        %512 = vst [vmem:[%s241] sm:$0xff] %v510
        %513 = vst [vmem:[%s241 + $0x8] sm:$0xff] %v511
        %v514 = vlaneseq
        %v515 = vshrl.u32 %v514, 7
        %vm516 = vcmp.eq.f32.partialorder %v472, %v483
        %vm517 = vcmp.eq.f32.partialorder %v474, %v489
        %v518 = vsel %vm516, %v515, 8
        %v519 = vsel %vm517, %v515, 8
        %v520 = vrot.slane %v518, 4
        %vm521 = vcmp.lt.s32.totalorder %v518, %v520
        %v522 = vsel %vm521, %v518, %v520
        %v523 = vrot.slane %v522, 2
        %vm524 = vcmp.lt.s32.totalorder %v522, %v523
        %v525 = vsel %vm524, %v522, %v523
        %v526 = vrot.slane %v525, 1
        %vm527 = vcmp.lt.s32.totalorder %v525, %v526
        %v528 = vsel %vm527, %v525, %v526
        %v529 = vrot.slane %v519, 4
        %vm530 = vcmp.lt.s32.totalorder %v519, %v529
        %v531 = vsel %vm530, %v519, %v529
        %v532 = vrot.slane %v531, 2
        %vm533 = vcmp.lt.s32.totalorder %v531, %v532
        %v534 = vsel %vm533, %v531, %v532
        %v535 = vrot.slane %v534, 1
        %vm536 = vcmp.lt.s32.totalorder %v534, %v535
        %v537 = vsel %vm536, %v534, %v535
        %v538 = vcombine.low %v528, %v537
        %v540 = vunpack.c.l.s4 1966171168
        %v541 = vunpack.c.0.s8 %v540
        %v542 = vlaneseq
        %v543 = vshrl.u32 %v542, 7
        %v544 = vsub.s32 %v541, %v543
        %v545 = vrot.slane %v538, %v544
        %v547 = vunpack.c.l.s4 1966171168
        %v548 = vunpack.c.0.s8 %v547
        %v549 = vlaneseq
        %v550 = vshrl.u32 %v549, 7
        %v551 = vsub.s32 %v548, %v550
        %v552 = vrot.slane %v545, %v551
        %v553 = vlaneseq
        %vm554 = vcmp.ge.s32.totalorder %v553, 0
        %vm555 = vcmp.lt.s32.totalorder %v553, 256
        %vm556 = vmand %vm554, %vm555
        %557 = vst.msk [vmem:[%s248] sm:$0x3] %vm556, %v552
        %s558 = sand.u32 %s99, 1
        %s559 = scalar_lea.sflag [#allocation3], %s558
        %s560 = sand.u32 %s99, 1
        %s561 = smul.addr %s560, 16
        %s562 = scalar_lea.vmem [#allocation2], %s561
        %s563 = sand.u32 %s23, 1
        %s564 = scalar_lea.sflag [#allocation5], %s563
        %s565 = sand.u32 %s125, 1
        %s566 = smul.addr %s565, 16
        %s567 = scalar_lea.vmem [#allocation4], %s566
        %s568 = sand.u32 %s23, 1
        %s569 = scalar_lea.sflag [#allocation5], %s568
        %s570 = sand.u32 %s151, 1
        %s571 = smul.addr %s570, 2
        %s572 = scalar_lea.vmem [#allocation6], %s571
        // Predicated region
        $region33: #{tpu_custom_call.1} parent=31 // pred_check
          %p573 = pneg %p109
        $region34: #{tpu_custom_call.1} parent=31 // pred_check_branch
          %575 = sbr.rel (%p573) target = $region36
        $region35: #{tpu_custom_call.1} parent=31 // pred_region
          %s576 = smul.u32 2, %s23
          %s578 = ssub.s32 256, 256
          %579 = vsyncadd %s559, %s578
          %s580 = smul.addr %s576, 128
          %s581 = scalar_lea.hbm %s3, %s580
          %s583 = sshll.u32 %s562, 4
          %s584 = int_to_ptr.vmem [resolvable:$true] %s583
          %586 = dma.vmem_to_hbm [thread:$0]  %s584, 256, %s581, %s559
        $region36: #{tpu_custom_call.1} parent=31 // pred_fallthru
          _
        // Predicated region
        $region37: #{tpu_custom_call.1} parent=31 // pred_check
          %p587 = pneg %p135
        $region38: #{tpu_custom_call.1} parent=31 // pred_check_branch
          %589 = sbr.rel (%p587) target = $region40
        $region39: #{tpu_custom_call.1} parent=31 // pred_region
          %s590 = smul.u32 2, %s23
          %s592 = ssub.s32 256, 256
          %593 = vsyncadd %s564, %s592
          %s594 = smul.addr %s590, 128
          %s595 = scalar_lea.hbm %s4, %s594
          %s597 = sshll.u32 %s567, 4
          %s598 = int_to_ptr.vmem [resolvable:$true] %s597
          %600 = dma.vmem_to_hbm [thread:$0]  %s598, 256, %s595, %s564
        $region40: #{tpu_custom_call.1} parent=31 // pred_fallthru
          _
        // Predicated region
        $region41: #{tpu_custom_call.1} parent=31 // pred_check
          %p601 = pneg %p161
        $region42: #{tpu_custom_call.1} parent=31 // pred_check_branch
          %603 = sbr.rel (%p601) target = $region44
        $region43: #{tpu_custom_call.1} parent=31 // pred_region
          %s604 = smul.u32 2, %s23
          %s606 = ssub.s32 32, 32
          %607 = vsyncadd %s569, %s606
          %s608 = smul.addr %s604, 16
          %s609 = scalar_lea.hbm %s5, %s608
          %s611 = sshll.u32 %s572, 4
          %s612 = int_to_ptr.vmem [resolvable:$true] %s611
          %614 = dma.vmem_to_hbm [thread:$0]  %s612, 32, %s609, %s569
        $region44: #{tpu_custom_call.1} parent=31 // pred_fallthru
          _
      $region32: #{tpu_custom_call.1} parent=5 // pred_fallthru
        _
      %p615 = scmp.le.s32.totalorder 2, %s18
      // Predicated region
      $region45: #{tpu_custom_call.1} parent=5 // pred_check
        %p616 = pneg %p615
      $region46: #{tpu_custom_call.1} parent=5 // pred_check_branch
        %618 = sbr.rel (%p616) target = $region48
      $region47: #{tpu_custom_call.1} parent=5 // pred_region
        %s619 = ssub.s32 %s18, 2
        // Predicated region
        $region49: #{tpu_custom_call.1} parent=47 // pred_check
          %p620 = pneg %p115
        $region50: #{tpu_custom_call.1} parent=47 // pred_check_branch
          %622 = sbr.rel (%p620) target = $region52
        $region51: #{tpu_custom_call.1} parent=47 // pred_region
          %s623 = sand.u32 %s100, 1
          %s624 = scalar_lea.sflag [#allocation3], %s623
          %s625 = sand.u32 %s100, 1
          %s626 = smul.addr %s625, 16
          %s627 = scalar_lea.vmem [#allocation2], %s626
          %628 = dma.done %s624, 256
        $region52: #{tpu_custom_call.1} parent=47 // pred_fallthru
          _
        // Predicated region
        $region53: #{tpu_custom_call.1} parent=47 // pred_check
          %p629 = pneg %p141
        $region54: #{tpu_custom_call.1} parent=47 // pred_check_branch
          %631 = sbr.rel (%p629) target = $region56
        $region55: #{tpu_custom_call.1} parent=47 // pred_region
          %s632 = sand.u32 %s24, 1
          %s633 = scalar_lea.sflag [#allocation5], %s632
          %s634 = sand.u32 %s126, 1
          %s635 = smul.addr %s634, 16
          %s636 = scalar_lea.vmem [#allocation4], %s635
          %637 = dma.done %s633, 256
        $region56: #{tpu_custom_call.1} parent=47 // pred_fallthru
          _
        // Predicated region
        $region57: #{tpu_custom_call.1} parent=47 // pred_check
          %p638 = pneg %p167
        $region58: #{tpu_custom_call.1} parent=47 // pred_check_branch
          %640 = sbr.rel (%p638) target = $region60
        $region59: #{tpu_custom_call.1} parent=47 // pred_region
          %s641 = sand.u32 %s24, 1
          %s642 = scalar_lea.sflag [#allocation5], %s641
          %s643 = sand.u32 %s152, 1
          %s644 = smul.addr %s643, 2
          %s645 = scalar_lea.vmem [#allocation6], %s644
          %646 = dma.done %s642, 32
        $region60: #{tpu_custom_call.1} parent=47 // pred_fallthru
          _
      $region48: #{tpu_custom_call.1} parent=5 // pred_fallthru
        _
    $region6: #{tpu_custom_call.1} parent=1 // loop_footer
      %s22 = sadd.s32 1, %s18
    $region7: #{tpu_custom_call.1} parent=1 // loop_footer_branch
      %17 = sbr.rel target = $region3
    $region8: #{tpu_custom_call.1} parent=1 // loop_exit
      _
    %647 = vsyncpa [#allocation3], 1
    %s648 = scalar_lea.sflag [#allocation3], 1
    %649 = vsyncpa %s648, 1
    %650 = vsyncpa [#allocation5], 1
    %s651 = scalar_lea.sflag [#allocation5], 1
    %652 = vsyncpa %s651, 1

</llo_original>
